<compile_context>
chip_gen: v7x
topology: tpu7x:2x2x1
jax: 0.10.0
libtpu: 0.0.40
codegen_flags: <defaults>
</compile_context>

<pallas_src>
import jax
import jax.numpy as jnp
from jax import lax
from jax.experimental import pallas as pl
from jax.experimental.pallas import tpu as pltpu

_VMEM = pltpu.MemorySpace.VMEM
_SMEM = pltpu.MemorySpace.SMEM


# ---------------------------------------------------------------------------
# Fused head: cnn_fc -> gcn_fc -> relu -> projection Linear (-> CE loss)
# ---------------------------------------------------------------------------
def _fused_logits(cnn_feat, gcn_feat, cnn_w, cnn_b, gcn_w, gcn_b,
                  pw_cnn, pw_gcn, pb):
    # Upstream fc layers (fused into this launch).
    cnn_out = jnp.dot(cnn_feat, cnn_w, preferred_element_type=jnp.float32) + cnn_b
    gcn_out = jnp.dot(gcn_feat, gcn_w, preferred_element_type=jnp.float32) + gcn_b
    # relu(cat([cnn_out, gcn_out], 1)) @ W_t + b, with W_t pre-split:
    logits = (jnp.dot(jnp.maximum(cnn_out, 0.0), pw_cnn,
                      preferred_element_type=jnp.float32)
              + jnp.dot(jnp.maximum(gcn_out, 0.0), pw_gcn,
                        preferred_element_type=jnp.float32)
              + pb)
    return logits


def _head_train_kernel(cnn_feat_ref, gcn_feat_ref, cnn_w_ref, cnn_b_ref,
                       gcn_w_ref, gcn_b_ref, pw_cnn_ref, pw_gcn_ref, pb_ref,
                       labels_ref, logits_ref, loss_ref):
    logits = _fused_logits(cnn_feat_ref[...], gcn_feat_ref[...],
                           cnn_w_ref[...], cnn_b_ref[...],
                           gcn_w_ref[...], gcn_b_ref[...],
                           pw_cnn_ref[...], pw_gcn_ref[...], pb_ref[...])
    logits_ref[...] = logits

    # torch.nn.CrossEntropyLoss (mean): mean_b( logsumexp(z_b) - z_b[y_b] )
    m = jnp.max(logits, axis=1, keepdims=True)
    lse = jnp.log(jnp.sum(jnp.exp(logits - m), axis=1, keepdims=True)) + m
    cls = lax.broadcasted_iota(jnp.int32, logits.shape, 1)
    picked = jnp.sum(jnp.where(cls == labels_ref[...], logits, 0.0),
                     axis=1, keepdims=True)
    loss_ref[0, 0] = jnp.mean(lse - picked)          # scalar -> SMEM (keep)


def _head_infer_kernel(cnn_feat_ref, gcn_feat_ref, cnn_w_ref, cnn_b_ref,
                       gcn_w_ref, gcn_b_ref, pw_cnn_ref, pw_gcn_ref, pb_ref,
                       logits_ref):
    logits_ref[...] = _fused_logits(cnn_feat_ref[...], gcn_feat_ref[...],
                                    cnn_w_ref[...], cnn_b_ref[...],
                                    gcn_w_ref[...], gcn_b_ref[...],
                                    pw_cnn_ref[...], pw_gcn_ref[...],
                                    pb_ref[...])


def projection_head(params, cnn_feat, gcn_feat, labels=None):
    """cnn_feat: [B, Fc] pooled CNN features (pre-fc), gcn_feat: [B, Fg] pooled
       GCN features (pre-fc). Weights are stored pre-transposed [in, out].
       Returns logits [B, N] (inference) or (loss [], logits) (training)."""
    B = cnn_feat.shape[0]
    N = params["proj_b"].shape[0]
    args = (cnn_feat, gcn_feat,
            params["cnn_fc_w"], params["cnn_fc_b"].reshape(1, -1),
            params["gcn_fc_w"], params["gcn_fc_b"].reshape(1, -1),
            params["proj_w_cnn_t"], params["proj_w_gcn_t"],
            params["proj_b"].reshape(1, N))

    if labels is None:
        # Inference-only kernel: no labels input, no CE math, no SMEM output.
        return pl.pallas_call(
            _head_infer_kernel,
            out_shape=jax.ShapeDtypeStruct((B, N), jnp.float32),
            in_specs=[pl.BlockSpec(memory_space=_VMEM)] * len(args),
            out_specs=pl.BlockSpec(memory_space=_VMEM),
        )(*args)

    labels2d = labels.astype(jnp.int32).reshape(B, 1)
    logits, loss = pl.pallas_call(
        _head_train_kernel,
        out_shape=(jax.ShapeDtypeStruct((B, N), jnp.float32),
                   jax.ShapeDtypeStruct((1, 1), jnp.float32)),
        in_specs=[pl.BlockSpec(memory_space=_VMEM)] * (len(args) + 1),
        out_specs=(pl.BlockSpec(memory_space=_VMEM),
                   pl.BlockSpec(memory_space=_SMEM)),
    )(*args, labels2d)
    return loss[0, 0], logits


# ---------------------------------------------------------------------------
# Deterministic stand-ins for the configmapper-resolved cnn / gcn backbones
# (plain-JAX glue; their final fc layers live in the Pallas kernel above).
# ---------------------------------------------------------------------------
def make_params(key, c_in, cnn_classes, gnn_feat, gnn_hidden, gnn_classes,
                num_classes):
    ks = jax.random.split(key, 9)
    return {
        # CNN backbone stand-in: 3x3 conv (HWIO) -> relu -> global avg pool.
        "conv_w": jax.random.normal(ks[0], (3, 3, c_in, 8), jnp.float32) * 0.1,
        "cnn_fc_w": jax.random.normal(ks[1], (8, cnn_classes), jnp.float32) * 0.1,
        "cnn_fc_b": jax.random.normal(ks[2], (cnn_classes,), jnp.float32) * 0.01,
        # GCN backbone stand-in: A @ X @ W -> relu -> mean pool.
        "gcn_w": jax.random.normal(ks[3], (gnn_feat, gnn_hidden), jnp.float32) * 0.1,
        "gcn_fc_w": jax.random.normal(ks[4], (gnn_hidden, gnn_classes), jnp.float32) * 0.1,
        "gcn_fc_b": jax.random.normal(ks[5], (gnn_classes,), jnp.float32) * 0.01,
        # Projection Linear weight, stored PRE-TRANSPOSED and PRE-SPLIT along
        # its input dim (equivalent to torch Linear weight [out, in] transposed
        # once at init and split at cnn_classes).
        "proj_w_cnn_t": jax.random.normal(ks[6], (cnn_classes, num_classes),
                                          jnp.float32) * 0.1,
        "proj_w_gcn_t": jax.random.normal(ks[7], (gnn_classes, num_classes),
                                          jnp.float32) * 0.1,
        "proj_b": jax.random.normal(ks[8], (num_classes,), jnp.float32) * 0.01,
    }


def cnn_backbone(params, image_nchw):
    x = jnp.transpose(image_nchw, (0, 2, 3, 1))               # NCHW -> NHWC
    y = lax.conv_general_dilated(x, params["conv_w"], window_strides=(1, 1),
                                 padding="SAME",
                                 dimension_numbers=("NHWC", "HWIO", "NHWC"))
    y = jnp.maximum(y, 0.0)
    return jnp.mean(y, axis=(1, 2))                           # [B, 8]


def gcn_backbone(params, node_feats, adj):
    h = jnp.einsum("bij,bjf->bif", adj, node_feats)           # aggregate
    h = jnp.maximum(h @ params["gcn_w"], 0.0)
    return jnp.mean(h, axis=1)                                # [B, hidden]


def projection_forward(params, image, graph, labels=None):
    cnn_feat = cnn_backbone(params, image)
    gcn_feat = gcn_backbone(params, graph[0], graph[1])
    return projection_head(params, cnn_feat, gcn_feat, labels)


if __name__ == "__main__":
    B, C_IN, HW = 8, 3, 16
    CNN_CLASSES, GNN_CLASSES, NUM_CLASSES = 4, 6, 5
    GNN_NODES, GNN_FEAT, GNN_HIDDEN = 10, 12, 16

    key = jax.random.PRNGKey(0)
    k_img, k_node, k_adj, k_lbl, k_param = jax.random.split(key, 5)

    image = jax.random.normal(k_img, (B, C_IN, HW, HW), jnp.float32)      # NCHW
    node_feats = jax.random.normal(k_node, (B, GNN_NODES, GNN_FEAT), jnp.float32)
    adj = (jax.random.uniform(k_adj, (B, GNN_NODES, GNN_NODES)) > 0.5).astype(jnp.float32)
    labels = jax.random.randint(k_lbl, (B,), 0, NUM_CLASSES, jnp.int32)

    params = make_params(k_param, C_IN, CNN_CLASSES, GNN_FEAT, GNN_HIDDEN,
                         GNN_CLASSES, NUM_CLASSES)

    # Training path (labels given) -> (loss, logits), matching the torch module.
    loss, logits = projection_forward(params, image, (node_feats, adj), labels)
    jax.block_until_ready((loss, logits))

    # Pure-JAX reference of the module semantics (concat -> relu -> Linear -> CE).
    cnn_feat = cnn_backbone(params, image)
    gcn_feat = gcn_backbone(params, node_feats, adj)
    cnn_out = cnn_feat @ params["cnn_fc_w"] + params["cnn_fc_b"]
    gcn_out = gcn_feat @ params["gcn_fc_w"] + params["gcn_fc_b"]
    feat = jnp.maximum(jnp.concatenate([cnn_out, gcn_out], axis=1), 0.0)
    w_t = jnp.concatenate([params["proj_w_cnn_t"], params["proj_w_gcn_t"]], axis=0)
    ref_logits = feat @ w_t + params["proj_b"]
    ref_lse = jax.scipy.special.logsumexp(ref_logits, axis=1)
    ref_loss = jnp.mean(ref_lse - ref_logits[jnp.arange(B), labels])
    assert jnp.allclose(logits, ref_logits, atol=1e-5), "logits mismatch"
    assert jnp.allclose(loss, ref_loss, atol=1e-5), "loss mismatch"

    # Inference path (labels=None) -> logits only, via the CE-free kernel.
    logits_only = projection_forward(params, image, (node_feats, adj))
    jax.block_until_ready(logits_only)
    assert jnp.allclose(logits_only, ref_logits, atol=1e-5), "inference logits mismatch"

    print("KERNEL_OK")
</pallas_src>

<mosaic_0001>
module attributes {stable_mosaic.version = 11 : i64} {
  func.func @_head_train_kernel(%arg0: memref<8x8xf32, #tpu.memory_space<vmem>>, %arg1: memref<8x16xf32, #tpu.memory_space<vmem>>, %arg2: memref<8x4xf32, #tpu.memory_space<vmem>>, %arg3: memref<1x4xf32, #tpu.memory_space<vmem>>, %arg4: memref<16x6xf32, #tpu.memory_space<vmem>>, %arg5: memref<1x6xf32, #tpu.memory_space<vmem>>, %arg6: memref<4x5xf32, #tpu.memory_space<vmem>>, %arg7: memref<6x5xf32, #tpu.memory_space<vmem>>, %arg8: memref<1x5xf32, #tpu.memory_space<vmem>>, %arg9: memref<8x1xi32, #tpu.memory_space<vmem>>, %arg10: memref<8x5xf32, #tpu.memory_space<vmem>>, %arg11: memref<1x1xf32, #tpu.memory_space<smem>>) attributes {dimension_semantics = [], scalar_prefetch = 0 : i64, scratch_operands = 0 : i64, tpu.core_type = #tpu.core_type<tc>} {
    %c0 = arith.constant 0 : index
    %c0_0 = arith.constant 0 : index
    %0 = vector.load %arg0[%c0, %c0_0] : memref<8x8xf32, #tpu.memory_space<vmem>>, vector<8x8xf32>
    %c0_1 = arith.constant 0 : index
    %c0_2 = arith.constant 0 : index
    %1 = vector.load %arg1[%c0_1, %c0_2] : memref<8x16xf32, #tpu.memory_space<vmem>>, vector<8x16xf32>
    %c0_3 = arith.constant 0 : index
    %c0_4 = arith.constant 0 : index
    %2 = vector.load %arg2[%c0_3, %c0_4] : memref<8x4xf32, #tpu.memory_space<vmem>>, vector<8x4xf32>
    %c0_5 = arith.constant 0 : index
    %c0_6 = arith.constant 0 : index
    %3 = vector.load %arg3[%c0_5, %c0_6] : memref<1x4xf32, #tpu.memory_space<vmem>>, vector<1x4xf32>
    %c0_7 = arith.constant 0 : index
    %c0_8 = arith.constant 0 : index
    %4 = vector.load %arg4[%c0_7, %c0_8] : memref<16x6xf32, #tpu.memory_space<vmem>>, vector<16x6xf32>
    %c0_9 = arith.constant 0 : index
    %c0_10 = arith.constant 0 : index
    %5 = vector.load %arg5[%c0_9, %c0_10] : memref<1x6xf32, #tpu.memory_space<vmem>>, vector<1x6xf32>
    %c0_11 = arith.constant 0 : index
    %c0_12 = arith.constant 0 : index
    %6 = vector.load %arg6[%c0_11, %c0_12] : memref<4x5xf32, #tpu.memory_space<vmem>>, vector<4x5xf32>
    %c0_13 = arith.constant 0 : index
    %c0_14 = arith.constant 0 : index
    %7 = vector.load %arg7[%c0_13, %c0_14] : memref<6x5xf32, #tpu.memory_space<vmem>>, vector<6x5xf32>
    %c0_15 = arith.constant 0 : index
    %c0_16 = arith.constant 0 : index
    %8 = vector.load %arg8[%c0_15, %c0_16] : memref<1x5xf32, #tpu.memory_space<vmem>>, vector<1x5xf32>
    %cst = arith.constant dense<0.000000e+00> : vector<8x4xf32>
    %9 = tpu.matmul %0, %2, %cst {dimension_numbers = #tpu.dot_dimension_numbers<[1], [0], [0], [1], [0, 0, 1, 1], [], []>} : vector<8x8xf32>, vector<8x4xf32>, vector<8x4xf32> -> vector<8x4xf32>
    %10 = vector.broadcast %3 : vector<1x4xf32> to vector<8x4xf32>
    %11 = arith.addf %9, %10 : vector<8x4xf32>
    %cst_17 = arith.constant dense<0.000000e+00> : vector<8x6xf32>
    %12 = tpu.matmul %1, %4, %cst_17 {dimension_numbers = #tpu.dot_dimension_numbers<[1], [0], [0], [1], [0, 0, 1, 1], [], []>} : vector<8x16xf32>, vector<16x6xf32>, vector<8x6xf32> -> vector<8x6xf32>
    %13 = vector.broadcast %5 : vector<1x6xf32> to vector<8x6xf32>
    %14 = arith.addf %12, %13 : vector<8x6xf32>
    %cst_18 = arith.constant 0.000000e+00 : f32
    %15 = vector.broadcast %cst_18 : f32 to vector<8x4xf32>
    %16 = arith.maximumf %11, %15 : vector<8x4xf32>
    %cst_19 = arith.constant dense<0.000000e+00> : vector<8x5xf32>
    %17 = tpu.matmul %16, %6, %cst_19 {dimension_numbers = #tpu.dot_dimension_numbers<[1], [0], [0], [1], [0, 0, 1, 1], [], []>} : vector<8x4xf32>, vector<4x5xf32>, vector<8x5xf32> -> vector<8x5xf32>
    %cst_20 = arith.constant 0.000000e+00 : f32
    %18 = vector.broadcast %cst_20 : f32 to vector<8x6xf32>
    %19 = arith.maximumf %14, %18 : vector<8x6xf32>
    %cst_21 = arith.constant dense<0.000000e+00> : vector<8x5xf32>
    %20 = tpu.matmul %19, %7, %cst_21 {dimension_numbers = #tpu.dot_dimension_numbers<[1], [0], [0], [1], [0, 0, 1, 1], [], []>} : vector<8x6xf32>, vector<6x5xf32>, vector<8x5xf32> -> vector<8x5xf32>
    %21 = arith.addf %17, %20 : vector<8x5xf32>
    %22 = vector.broadcast %8 : vector<1x5xf32> to vector<8x5xf32>
    %23 = arith.addf %21, %22 : vector<8x5xf32>
    %c0_22 = arith.constant 0 : index
    %c0_23 = arith.constant 0 : index
    %24 = vector.load %arg10[%c0_22, %c0_23] : memref<8x5xf32, #tpu.memory_space<vmem>>, vector<8x5xf32>
    tpu.vector_store %arg10[%c0_22, %c0_23], %23 {strides = array<i32>} : memref<8x5xf32, #tpu.memory_space<vmem>>, vector<8x5xf32>,
    %cst_24 = arith.constant dense<0xFF800000> : vector<8xf32>
    %25 = vector.multi_reduction <maximumf>, %23, %cst_24 [1] : vector<8x5xf32> to vector<8xf32>
    %26 = vector.shape_cast %25 : vector<8xf32> to vector<8x1xf32>
    %27 = vector.broadcast %26 : vector<8x1xf32> to vector<8x5xf32>
    %28 = arith.subf %23, %27 : vector<8x5xf32>
    %29 = math.exp %28 : vector<8x5xf32>
    %cst_25 = arith.constant dense<0.000000e+00> : vector<8xf32>
    %30 = vector.multi_reduction <add>, %29, %cst_25 [1] : vector<8x5xf32> to vector<8xf32>
    %31 = vector.shape_cast %30 : vector<8xf32> to vector<8x1xf32>
    %32 = math.log %31 : vector<8x1xf32>
    %33 = arith.addf %32, %26 : vector<8x1xf32>
    %34 = tpu.iota {dimensions = array<i32: 1>} : vector<8x5xi32>
    %c0_26 = arith.constant 0 : index
    %c0_27 = arith.constant 0 : index
    %35 = vector.load %arg9[%c0_26, %c0_27] : memref<8x1xi32, #tpu.memory_space<vmem>>, vector<8x1xi32>
    %36 = vector.broadcast %35 : vector<8x1xi32> to vector<8x5xi32>
    %37 = arith.cmpi eq, %34, %36 : vector<8x5xi32>
    %cst_28 = arith.constant 0.000000e+00 : f32
    %38 = vector.broadcast %cst_28 : f32 to vector<8x5xf32>
    %39 = arith.select %37, %23, %38 : vector<8x5xi1>, vector<8x5xf32>
    %cst_29 = arith.constant dense<0.000000e+00> : vector<8xf32>
    %40 = vector.multi_reduction <add>, %39, %cst_29 [1] : vector<8x5xf32> to vector<8xf32>
    %41 = vector.shape_cast %40 : vector<8xf32> to vector<8x1xf32>
    %42 = arith.subf %33, %41 : vector<8x1xf32>
    %43 = vector.shape_cast %42 : vector<8x1xf32> to vector<1x8x1xf32>
    %cst_30 = arith.constant dense<0.000000e+00> : vector<1xf32>
    %44 = vector.multi_reduction <add>, %43, %cst_30 [1, 2] : vector<1x8x1xf32> to vector<1xf32>
    %45 = vector.shape_cast %44 : vector<1xf32> to vector<1x1x1xf32>
    %46 = vector.extract %45[0, 0, 0] : f32 from vector<1x1x1xf32>
    %cst_31 = arith.constant 8.000000e+00 : f32
    %47 = arith.divf %46, %cst_31 : f32
    %c0_32 = arith.constant 0 : index
    %c0_33 = arith.constant 0 : index
    %48 = memref.load %arg11[%c0_32, %c0_33] : memref<1x1xf32, #tpu.memory_space<smem>>
    memref.store %47, %arg11[%c0_32, %c0_33] : memref<1x1xf32, #tpu.memory_space<smem>>
    return
  }
}

</mosaic_0001>

<llo_original>
// kernel: tpu_custom_call.1
$region0: #{tpu_custom_call.1}
  #allocation0 [shape = 'u32[]', space=smem, size = 0x4, offset = 0x4, fixed_abs, tag = 'smem constant byte address 0x4 - core index']
  #allocation1 [shape = 'u32[144,128]{1,0:T(1,128)}', space=vmem, size = 0x12000, scoped, tag = 'internal scratch']
  %s0 = inlined_call_operand.vmem [shape: f32[8,8], index: 0, kind: input, shape index: {}]
  %s1 = inlined_call_operand.vmem [shape: f32[8,16], index: 1, kind: input, shape index: {}]
  %s2 = inlined_call_operand.vmem [shape: f32[8,4], index: 2, kind: input, shape index: {}]
  %s3 = inlined_call_operand.vmem [shape: f32[1,4], index: 3, kind: input, shape index: {}]
  %s4 = inlined_call_operand.vmem [shape: f32[16,6], index: 4, kind: input, shape index: {}]
  %s5 = inlined_call_operand.vmem [shape: f32[1,6], index: 5, kind: input, shape index: {}]
  %s6 = inlined_call_operand.vmem [shape: f32[4,5], index: 6, kind: input, shape index: {}]
  %s7 = inlined_call_operand.vmem [shape: f32[6,5], index: 7, kind: input, shape index: {}]
  %s8 = inlined_call_operand.vmem [shape: f32[1,5], index: 8, kind: input, shape index: {}]
  %s9 = inlined_call_operand.vmem [shape: s32[8,1], index: 9, kind: input, shape index: {}]
  %s10 = inlined_call_operand.hbm [shape: f32[8,5], index: 10, kind: output, shape index: {0}]
  %s11 = inlined_call_operand.hbm [shape: f32[1,1], index: 11, kind: output, shape index: {1}]
  %12 = xla_tuple %s10, %s11
  %s13 = sld [smem:[#allocation0]]
  $region58: #{tpu_custom_call.1} parent=0
    _
  %s15 = ssub.s32 1, %s13
  %s16 = scalar_select 0, %s15, %s13
  $region1: #{tpu_custom_call.1} parent=0
    #allocation2 [shape = 'u8[4096]{0}', space=vmem, size = 0x1000, scoped, tag = 'output window, operand 0, single buffered']
    #allocation3 [shape = 's32[1]{0}', space=sflag, size = 0x4, scoped, tag = 'scoped memory for tpu_custom_call.1']
    #allocation4 [shape = 's32[1]{0}', space=sflag, size = 0x4, scoped, tag = 'scoped memory for tpu_custom_call.1']
    #allocation5 [shape = 'u8[512]{0}', space=smem, size = 0x200, scoped, tag = 'output window, operand 1, single buffered']
    %17 = vsyncpa [#allocation3], 0
    %18 = vsyncpa [#allocation4], 0
    // Predicated region
    $region2: #{tpu_custom_call.1} parent=1 // pred_check
      _
    $region3: #{tpu_custom_call.1} parent=1 // pred_check_branch
      %20 = sbr.rel (0) target = $region5
    $region4: #{tpu_custom_call.1} parent=1 // pred_region
      _
    $region5: #{tpu_custom_call.1} parent=1 // pred_fallthru
      _
    // Predicated region
    $region6: #{tpu_custom_call.1} parent=1 // pred_check
      _
    $region7: #{tpu_custom_call.1} parent=1 // pred_check_branch
      %22 = sbr.rel (0) target = $region9
    $region8: #{tpu_custom_call.1} parent=1 // pred_region
      _
    $region9: #{tpu_custom_call.1} parent=1 // pred_fallthru
      _
    // Predicated region
    $region10: #{tpu_custom_call.1} parent=1 // pred_check
      _
    $region11: #{tpu_custom_call.1} parent=1 // pred_check_branch
      %24 = sbr.rel (0) target = $region13
    $region12: #{tpu_custom_call.1} parent=1 // pred_region
      _
    $region13: #{tpu_custom_call.1} parent=1 // pred_fallthru
      _
    // Predicated region
    $region14: #{tpu_custom_call.1} parent=1 // pred_check
      _
    $region15: #{tpu_custom_call.1} parent=1 // pred_check_branch
      %26 = sbr.rel (0) target = $region17
    $region16: #{tpu_custom_call.1} parent=1 // pred_region
      _
    $region17: #{tpu_custom_call.1} parent=1 // pred_fallthru
      _
    // Predicated region
    $region18: #{tpu_custom_call.1} parent=1 // pred_check
      _
    $region19: #{tpu_custom_call.1} parent=1 // pred_check_branch
      %28 = sbr.rel (0) target = $region21
    $region20: #{tpu_custom_call.1} parent=1 // pred_region
      _
    $region21: #{tpu_custom_call.1} parent=1 // pred_fallthru
      _
    // Predicated region
    $region22: #{tpu_custom_call.1} parent=1 // pred_check
      _
    $region23: #{tpu_custom_call.1} parent=1 // pred_check_branch
      %30 = sbr.rel (0) target = $region25
    $region24: #{tpu_custom_call.1} parent=1 // pred_region
      _
    $region25: #{tpu_custom_call.1} parent=1 // pred_fallthru
      _
    // Predicated region
    $region26: #{tpu_custom_call.1} parent=1 // pred_check
      _
    $region27: #{tpu_custom_call.1} parent=1 // pred_check_branch
      %32 = sbr.rel (0) target = $region29
    $region28: #{tpu_custom_call.1} parent=1 // pred_region
      _
    $region29: #{tpu_custom_call.1} parent=1 // pred_fallthru
      _
    // Predicated region
    $region30: #{tpu_custom_call.1} parent=1 // pred_check
      _
    $region31: #{tpu_custom_call.1} parent=1 // pred_check_branch
      %34 = sbr.rel (0) target = $region33
    $region32: #{tpu_custom_call.1} parent=1 // pred_region
      _
    $region33: #{tpu_custom_call.1} parent=1 // pred_fallthru
      _
    // Predicated region
    $region34: #{tpu_custom_call.1} parent=1 // pred_check
      _
    $region35: #{tpu_custom_call.1} parent=1 // pred_check_branch
      %36 = sbr.rel (0) target = $region37
    $region36: #{tpu_custom_call.1} parent=1 // pred_region
      _
    $region37: #{tpu_custom_call.1} parent=1 // pred_fallthru
      _
    // Predicated region
    $region38: #{tpu_custom_call.1} parent=1 // pred_check
      _
    $region39: #{tpu_custom_call.1} parent=1 // pred_check_branch
      %38 = sbr.rel (0) target = $region41
    $region40: #{tpu_custom_call.1} parent=1 // pred_region
      _
    $region41: #{tpu_custom_call.1} parent=1 // pred_fallthru
      _
    %v39 = vld [vmem:[%s0] sm:$0xff]
    %v40 = vld [vmem:[%s1] sm:$0xff]
    %v41 = vld [vmem:[%s2] sm:$0xff]
    %v42 = vld [vmem:[%s3] sm:$0x1]
    %v43 = vld [vmem:[%s4] sm:$0xff]
    %v44 = vld [vmem:[%s4 + $0x8] sm:$0xff]
    %v45 = vld [vmem:[%s5] sm:$0x1]
    %v46 = vld [vmem:[%s6] sm:$0xf]
    %v47 = vld [vmem:[%s7] sm:$0x3f]
    %v48 = vld [vmem:[%s8] sm:$0x1]
    %v50 = vlaneseq
    %v51 = vshrl.u32 %v50, 7
    %v52 = vsub.s32 0, %v51
    %v53 = vrot.slane %v42, %v52
    %vm55 = vcmask 64512
    %v57 = vsel %vm55, %v39, 0
    %59 = vmatprep.subr.mxu0 0.0
    %60 = vmatpush1.msra.mxu0 %v41
    %61 = vmatprep.subr.mxu0 0.0
    %62 = vmatpush1.msra.mxu0 0.0
    %63 = vmatprep.subr.mxu0 0.0
    %64 = vmatpush1.msra.mxu0 0.0
    %65 = vmatprep.subr.mxu0 0.0
    %66 = vmatpush1.msra.mxu0 0.0
    %67 = vmatprep.subr.mxu0 0.0
    %68 = vmatpush1.msra.mxu0 0.0
    %69 = vmatprep.subr.mxu0 0.0
    %70 = vmatpush1.msra.mxu0 0.0
    %71 = vmatprep.subr.mxu0 0.0
    %72 = vmatpush1.msra.mxu0 0.0
    %73 = vmatprep.subr.mxu0 0.0
    %74 = vmatpush1.msra.mxu0 0.0
    %75 = vmatprep.subr.mxu0 0.0
    %76 = vmatpush1.msra.mxu0 0.0
    %77 = vmatprep.subr.mxu0 0.0
    %78 = vmatpush1.msra.mxu0 0.0
    %79 = vmatprep.subr.mxu0 0.0
    %80 = vmatpush1.msra.mxu0 0.0
    %81 = vmatprep.subr.mxu0 0.0
    %82 = vmatpush1.msra.mxu0 0.0
    %83 = vmatprep.subr.mxu0 0.0
    %84 = vmatpush1.msra.mxu0 0.0
    %85 = vmatprep.subr.mxu0 0.0
    %86 = vmatpush1.msra.mxu0 0.0
    %87 = vmatprep.subr.mxu0 0.0
    %88 = vmatpush1.msra.mxu0 0.0
    %89 = vmatprep.subr.mxu0 0.0
    %90 = vmatpush1.msra.mxu0 0.0
    %91 = vmatprep.subr.mxu0 0.0
    %92 = vmatpush1.msra.mxu0 0.0
    %93 = vmatprep.subr.mxu0 0.0
    %94 = vmatpush1.msra.mxu0 0.0
    %95 = vmatprep.subr.mxu0 0.0
    %96 = vmatpush1.msra.mxu0 0.0
    %97 = vmatprep.subr.mxu0 0.0
    %98 = vmatpush1.msra.mxu0 0.0
    %99 = vmatprep.subr.mxu0 0.0
    %100 = vmatpush1.msra.mxu0 0.0
    %101 = vmatprep.subr.mxu0 0.0
    %102 = vmatpush1.msra.mxu0 0.0
    %103 = vmatprep.subr.mxu0 0.0
    %104 = vmatpush1.msra.mxu0 0.0
    %105 = vmatprep.subr.mxu0 0.0
    %106 = vmatpush1.msra.mxu0 0.0
    %107 = vmatprep.subr.mxu0 0.0
    %108 = vmatpush1.msra.mxu0 0.0
    %109 = vmatprep.subr.mxu0 0.0
    %110 = vmatpush1.msra.mxu0 0.0
    %111 = vmatprep.subr.mxu0 0.0
    %112 = vmatpush1.msra.mxu0 0.0
    %113 = vmatprep.subr.mxu0 0.0
    %114 = vmatpush1.msra.mxu0 0.0
    %115 = vmatprep.subr.mxu0 0.0
    %116 = vmatpush1.msra.mxu0 0.0
    %117 = vmatprep.subr.mxu0 0.0
    %118 = vmatpush1.msra.mxu0 0.0
    %119 = vmatprep.subr.mxu0 0.0
    %120 = vmatpush1.msra.mxu0 0.0
    %121 = vmatprep.subr.mxu0 0.0
    %122 = vmatpush1.msra.mxu0 0.0
    %123 = vmatprep.mubr.f32.mxu0 0.0
    %124 = vmatmul.mubr.f32.gmra.mrb[0].mxu0 %v57
    %v125 = vpop.f32.mrb[0].mxu0
    %v126 = vadd.f32 %v53, %v125
    %v127 = vpop.f32.mrb[0].mxu0
    %128 = vdwg.mxu0
    %v130 = vlaneseq
    %v131 = vshrl.u32 %v130, 7
    %v132 = vsub.s32 0, %v131
    %v133 = vrot.slane %v45, %v132
    %vm135 = vcmask 130048
    %v137 = vsel %vm135, %v40, 0
    %139 = vmatprep.subr.mxu0 0.0
    %140 = vmatpush1.msra.mxu0 %v43
    %141 = vmatprep.subr.mxu0 0.0
    %142 = vmatpush1.msra.mxu0 %v44
    %143 = vmatprep.subr.mxu0 0.0
    %144 = vmatpush1.msra.mxu0 0.0
    %145 = vmatprep.subr.mxu0 0.0
    %146 = vmatpush1.msra.mxu0 0.0
    %147 = vmatprep.subr.mxu0 0.0
    %148 = vmatpush1.msra.mxu0 0.0
    %149 = vmatprep.subr.mxu0 0.0
    %150 = vmatpush1.msra.mxu0 0.0
    %151 = vmatprep.subr.mxu0 0.0
    %152 = vmatpush1.msra.mxu0 0.0
    %153 = vmatprep.subr.mxu0 0.0
    %154 = vmatpush1.msra.mxu0 0.0
    %155 = vmatprep.subr.mxu0 0.0
    %156 = vmatpush1.msra.mxu0 0.0
    %157 = vmatprep.subr.mxu0 0.0
    %158 = vmatpush1.msra.mxu0 0.0
    %159 = vmatprep.subr.mxu0 0.0
    %160 = vmatpush1.msra.mxu0 0.0
    %161 = vmatprep.subr.mxu0 0.0
    %162 = vmatpush1.msra.mxu0 0.0
    %163 = vmatprep.subr.mxu0 0.0
    %164 = vmatpush1.msra.mxu0 0.0
    %165 = vmatprep.subr.mxu0 0.0
    %166 = vmatpush1.msra.mxu0 0.0
    %167 = vmatprep.subr.mxu0 0.0
    %168 = vmatpush1.msra.mxu0 0.0
    %169 = vmatprep.subr.mxu0 0.0
    %170 = vmatpush1.msra.mxu0 0.0
    %171 = vmatprep.subr.mxu0 0.0
    %172 = vmatpush1.msra.mxu0 0.0
    %173 = vmatprep.subr.mxu0 0.0
    %174 = vmatpush1.msra.mxu0 0.0
    %175 = vmatprep.subr.mxu0 0.0
    %176 = vmatpush1.msra.mxu0 0.0
    %177 = vmatprep.subr.mxu0 0.0
    %178 = vmatpush1.msra.mxu0 0.0
    %179 = vmatprep.subr.mxu0 0.0
    %180 = vmatpush1.msra.mxu0 0.0
    %181 = vmatprep.subr.mxu0 0.0
    %182 = vmatpush1.msra.mxu0 0.0
    %183 = vmatprep.subr.mxu0 0.0
    %184 = vmatpush1.msra.mxu0 0.0
    %185 = vmatprep.subr.mxu0 0.0
    %186 = vmatpush1.msra.mxu0 0.0
    %187 = vmatprep.subr.mxu0 0.0
    %188 = vmatpush1.msra.mxu0 0.0
    %189 = vmatprep.subr.mxu0 0.0
    %190 = vmatpush1.msra.mxu0 0.0
    %191 = vmatprep.subr.mxu0 0.0
    %192 = vmatpush1.msra.mxu0 0.0
    %193 = vmatprep.subr.mxu0 0.0
    %194 = vmatpush1.msra.mxu0 0.0
    %195 = vmatprep.subr.mxu0 0.0
    %196 = vmatpush1.msra.mxu0 0.0
    %197 = vmatprep.subr.mxu0 0.0
    %198 = vmatpush1.msra.mxu0 0.0
    %199 = vmatprep.subr.mxu0 0.0
    %200 = vmatpush1.msra.mxu0 0.0
    %201 = vmatprep.subr.mxu0 0.0
    %202 = vmatpush1.msra.mxu0 0.0
    %203 = vmatprep.mubr.f32.mxu0 0.0
    %204 = vmatmul.mubr.f32.gmra.mrb[0].mxu0 %v137
    %v205 = vpop.f32.mrb[0].mxu0
    %v206 = vadd.f32 %v133, %v205
    %v207 = vpop.f32.mrb[0].mxu0
    %208 = vdwg.mxu0
    %v209 = vmax.f32 %v126, 0.0
    %v210 = vmax.f32 %v206, 0.0
    %vm211 = vcmask 48128
    %v213 = vsel %vm211, %v210, 0
    %vm215 = vcmask 1045504
    %v217 = vsel %vm215, %v47, 0
    %219 = vmatprep.subr.mxu0 0.0
    %220 = vmatpush1.msra.mxu0 %v217
    %221 = vmatprep.subr.mxu0 0.0
    %222 = vmatpush1.msra.mxu0 0.0
    %223 = vmatprep.subr.mxu0 0.0
    %224 = vmatpush1.msra.mxu0 0.0
    %225 = vmatprep.subr.mxu0 0.0
    %226 = vmatpush1.msra.mxu0 0.0
    %227 = vmatprep.subr.mxu0 0.0
    %228 = vmatpush1.msra.mxu0 0.0
    %229 = vmatprep.subr.mxu0 0.0
    %230 = vmatpush1.msra.mxu0 0.0
    %231 = vmatprep.subr.mxu0 0.0
    %232 = vmatpush1.msra.mxu0 0.0
    %233 = vmatprep.subr.mxu0 0.0
    %234 = vmatpush1.msra.mxu0 0.0
    %235 = vmatprep.subr.mxu0 0.0
    %236 = vmatpush1.msra.mxu0 0.0
    %237 = vmatprep.subr.mxu0 0.0
    %238 = vmatpush1.msra.mxu0 0.0
    %239 = vmatprep.subr.mxu0 0.0
    %240 = vmatpush1.msra.mxu0 0.0
    %241 = vmatprep.subr.mxu0 0.0
    %242 = vmatpush1.msra.mxu0 0.0
    %243 = vmatprep.subr.mxu0 0.0
    %244 = vmatpush1.msra.mxu0 0.0
    %245 = vmatprep.subr.mxu0 0.0
    %246 = vmatpush1.msra.mxu0 0.0
    %247 = vmatprep.subr.mxu0 0.0
    %248 = vmatpush1.msra.mxu0 0.0
    %249 = vmatprep.subr.mxu0 0.0
    %250 = vmatpush1.msra.mxu0 0.0
    %251 = vmatprep.subr.mxu0 0.0
    %252 = vmatpush1.msra.mxu0 0.0
    %253 = vmatprep.subr.mxu0 0.0
    %254 = vmatpush1.msra.mxu0 0.0
    %255 = vmatprep.subr.mxu0 0.0
    %256 = vmatpush1.msra.mxu0 0.0
    %257 = vmatprep.subr.mxu0 0.0
    %258 = vmatpush1.msra.mxu0 0.0
    %259 = vmatprep.subr.mxu0 0.0
    %260 = vmatpush1.msra.mxu0 0.0
    %261 = vmatprep.subr.mxu0 0.0
    %262 = vmatpush1.msra.mxu0 0.0
    %263 = vmatprep.subr.mxu0 0.0
    %264 = vmatpush1.msra.mxu0 0.0
    %265 = vmatprep.subr.mxu0 0.0
    %266 = vmatpush1.msra.mxu0 0.0
    %267 = vmatprep.subr.mxu0 0.0
    %268 = vmatpush1.msra.mxu0 0.0
    %269 = vmatprep.subr.mxu0 0.0
    %270 = vmatpush1.msra.mxu0 0.0
    %271 = vmatprep.subr.mxu0 0.0
    %272 = vmatpush1.msra.mxu0 0.0
    %273 = vmatprep.subr.mxu0 0.0
    %274 = vmatpush1.msra.mxu0 0.0
    %275 = vmatprep.subr.mxu0 0.0
    %276 = vmatpush1.msra.mxu0 0.0
    %277 = vmatprep.subr.mxu0 0.0
    %278 = vmatpush1.msra.mxu0 0.0
    %279 = vmatprep.subr.mxu0 0.0
    %280 = vmatpush1.msra.mxu0 0.0
    %281 = vmatprep.subr.mxu0 0.0
    %282 = vmatpush1.msra.mxu0 0.0
    %283 = vmatprep.mubr.f32.mxu0 0.0
    %284 = vmatmul.mubr.f32.gmra.mrb[0].mxu0 %v213
    %v285 = vpop.f32.mrb[0].mxu0
    %v286 = vadd.f32 0.0, %v285
    %v287 = vpop.f32.mrb[0].mxu0
    %288 = vdwg.mxu0
    %vm289 = vcmask 31744
    %v291 = vsel %vm289, %v209, 0
    %vm293 = vcmask 1043456
    %v295 = vsel %vm293, %v46, 0
    %297 = vmatprep.subr.mxu0 0.0
    %298 = vmatpush1.msra.mxu0 %v295
    %299 = vmatprep.subr.mxu0 0.0
    %300 = vmatpush1.msra.mxu0 0.0
    %301 = vmatprep.subr.mxu0 0.0
    %302 = vmatpush1.msra.mxu0 0.0
    %303 = vmatprep.subr.mxu0 0.0
    %304 = vmatpush1.msra.mxu0 0.0
    %305 = vmatprep.subr.mxu0 0.0
    %306 = vmatpush1.msra.mxu0 0.0
    %307 = vmatprep.subr.mxu0 0.0
    %308 = vmatpush1.msra.mxu0 0.0
    %309 = vmatprep.subr.mxu0 0.0
    %310 = vmatpush1.msra.mxu0 0.0
    %311 = vmatprep.subr.mxu0 0.0
    %312 = vmatpush1.msra.mxu0 0.0
    %313 = vmatprep.subr.mxu0 0.0
    %314 = vmatpush1.msra.mxu0 0.0
    %315 = vmatprep.subr.mxu0 0.0
    %316 = vmatpush1.msra.mxu0 0.0
    %317 = vmatprep.subr.mxu0 0.0
    %318 = vmatpush1.msra.mxu0 0.0
    %319 = vmatprep.subr.mxu0 0.0
    %320 = vmatpush1.msra.mxu0 0.0
    %321 = vmatprep.subr.mxu0 0.0
    %322 = vmatpush1.msra.mxu0 0.0
    %323 = vmatprep.subr.mxu0 0.0
    %324 = vmatpush1.msra.mxu0 0.0
    %325 = vmatprep.subr.mxu0 0.0
    %326 = vmatpush1.msra.mxu0 0.0
    %327 = vmatprep.subr.mxu0 0.0
    %328 = vmatpush1.msra.mxu0 0.0
    %329 = vmatprep.subr.mxu0 0.0
    %330 = vmatpush1.msra.mxu0 0.0
    %331 = vmatprep.subr.mxu0 0.0
    %332 = vmatpush1.msra.mxu0 0.0
    %333 = vmatprep.subr.mxu0 0.0
    %334 = vmatpush1.msra.mxu0 0.0
    %335 = vmatprep.subr.mxu0 0.0
    %336 = vmatpush1.msra.mxu0 0.0
    %337 = vmatprep.subr.mxu0 0.0
    %338 = vmatpush1.msra.mxu0 0.0
    %339 = vmatprep.subr.mxu0 0.0
    %340 = vmatpush1.msra.mxu0 0.0
    %341 = vmatprep.subr.mxu0 0.0
    %342 = vmatpush1.msra.mxu0 0.0
    %343 = vmatprep.subr.mxu0 0.0
    %344 = vmatpush1.msra.mxu0 0.0
    %345 = vmatprep.subr.mxu0 0.0
    %346 = vmatpush1.msra.mxu0 0.0
    %347 = vmatprep.subr.mxu0 0.0
    %348 = vmatpush1.msra.mxu0 0.0
    %349 = vmatprep.subr.mxu0 0.0
    %350 = vmatpush1.msra.mxu0 0.0
    %351 = vmatprep.subr.mxu0 0.0
    %352 = vmatpush1.msra.mxu0 0.0
    %353 = vmatprep.subr.mxu0 0.0
    %354 = vmatpush1.msra.mxu0 0.0
    %355 = vmatprep.subr.mxu0 0.0
    %356 = vmatpush1.msra.mxu0 0.0
    %357 = vmatprep.subr.mxu0 0.0
    %358 = vmatpush1.msra.mxu0 0.0
    %359 = vmatprep.subr.mxu0 0.0
    %360 = vmatpush1.msra.mxu0 0.0
    %361 = vmatprep.mubr.f32.mxu0 0.0
    %362 = vmatmul.mubr.f32.gmra.mrb[0].mxu0 %v291
    %v363 = vpop.f32.mrb[0].mxu0
    %v364 = vadd.f32 %v286, %v363
    %v365 = vpop.f32.mrb[0].mxu0
    %366 = vdwg.mxu0
    %v368 = vlaneseq
    %v369 = vshrl.u32 %v368, 7
    %v370 = vsub.s32 0, %v369
    %v371 = vrot.slane %v48, %v370
    %v373 = vadd.f32 %v364, %v371
    %vm374 = vcmask 39936
    %375 = vst.msk [vmem:[#allocation2] sm:$0xff] %vm374, %v373
    %v376 = vsel %vm374, %v373, -inf
    %377 = vmax.xlane.f32.xlu0 %v376
    %v378 = vpop.xlane.xlu0 %377
    %v379 = vsub.f32 %v373, %v378
    %v380 = vmul.f32 %v379, 1.442695
    %v381 = vpow.pop %v380
    %v382 = vsel %vm374, %v381, 0.0
    %383 = vadd.xlane.f32.xlu0 %v382
    %v384 = vpop.xlane.xlu0 %383
    %v385 = vlog2.pop %v384
    %v386 = vmul.f32 %v385, 0.6931472
    %v387 = vadd.f32 %v386, %v378
    %v388 = vlaneseq
    %v389 = vand.u32 %v388, 127
    %v390 = vld [vmem:[%s9] sm:$0xff]
    %391 = vset.pattern.permute.xlu0 0
    %392 = vperm.xlu0 %391, %v390
    %v393 = vpop.permute.xlu0 %392
    %vm394 = vcmp.eq.s32.totalorder %v389, %v393
    %v395 = vsel %vm394, %v373, 0.0
    %v396 = vsel %vm374, %v395, 0.0
    %397 = vadd.xlane.f32.xlu0 %v396
    %v398 = vpop.xlane.xlu0 %397
    %v399 = vsub.f32 %v387, %v398
    %vm400 = vcmask 7168
    %v401 = vsel %vm400, %v399, 0.0
    %402 = vadd.xlane.f32.xlu0 %v401
    %v403 = vpop.xlane.xlu0 %402
    %v404 = vrot.slane %v403, 4
    %v405 = vadd.f32 %v403, %v404
    %v406 = vrot.slane %v405, 2
    %v407 = vadd.f32 %v405, %v406
    %v408 = vrot.slane %v407, 1
    %v409 = vadd.f32 %v407, %v408
    %s410 = vtos %v409
    %v411 = vrcp.pop 8.0
    %s412 = vtos %v411
    %s413 = smul.f32 %s410, %s412
    %s414 = scalar_lea.smem [#allocation5], 0
    %415 = sst [smem:[%s414]] %s413
    // Predicated region
    $region42: #{tpu_custom_call.1} parent=1 // pred_check
      _
    $region43: #{tpu_custom_call.1} parent=1 // pred_check_branch
      %417 = sbr.rel (0) target = $region45
    $region44: #{tpu_custom_call.1} parent=1 // pred_region
      %s419 = ssub.s32 128, 128
      %420 = vsyncadd [#allocation3], %s419
      %s422 = sshll.u32 [#allocation2], 4
      %s423 = int_to_ptr.vmem [resolvable:$true] %s422
      %425 = dma.vmem_to_hbm [thread:$0]  %s423, 128, %s10, [#allocation3]
    $region45: #{tpu_custom_call.1} parent=1 // pred_fallthru
      _
    // Predicated region
    $region46: #{tpu_custom_call.1} parent=1 // pred_check
      _
    $region47: #{tpu_custom_call.1} parent=1 // pred_check_branch
      %427 = sbr.rel (0) target = $region49
    $region48: #{tpu_custom_call.1} parent=1 // pred_region
      %s429 = ssub.s32 16, 16
      %430 = vsyncadd [#allocation4], %s429
      %433 = dma.smem_to_hbm [#allocation5], 16, %s11, [#allocation4]
    $region49: #{tpu_custom_call.1} parent=1 // pred_fallthru
      _
    // Predicated region
    $region50: #{tpu_custom_call.1} parent=1 // pred_check
      _
    $region51: #{tpu_custom_call.1} parent=1 // pred_check_branch
      %435 = sbr.rel (0) target = $region53
    $region52: #{tpu_custom_call.1} parent=1 // pred_region
      %436 = dma.done [#allocation3], 128
    $region53: #{tpu_custom_call.1} parent=1 // pred_fallthru
      _
    // Predicated region
    $region54: #{tpu_custom_call.1} parent=1 // pred_check
      _
    $region55: #{tpu_custom_call.1} parent=1 // pred_check_branch
      %438 = sbr.rel (0) target = $region57
    $region56: #{tpu_custom_call.1} parent=1 // pred_region
      %439 = dma.done [#allocation4], 16
    $region57: #{tpu_custom_call.1} parent=1 // pred_fallthru
      _
    %440 = sfence
    %441 = vsyncpa [#allocation3], 1
    %442 = vsyncpa [#allocation4], 1

</llo_original>
